<compile_context>
chip_gen: v7x
topology: tpu7x:2x2x1
jax: 0.10.0
libtpu: 0.0.40
codegen_flags: <defaults>
</compile_context>

<pallas_src>
import functools

import jax
import jax.numpy as jnp
from jax.experimental import pallas as pl
from jax.experimental.pallas import tpu as pltpu

_LANE = 128


def _round_up(v, m):
    return ((v + m - 1) // m) * m


def _round_down(v, m):
    return (v // m) * m


def _vmem_capacity_bytes():
    try:
        cap = int(getattr(pltpu.get_tpu_info(), "vmem_capacity_bytes", 0))
        if cap > 0:
            return cap
    except Exception:
        pass
    return 64 << 20  # conservative fallback = v7x per-TC VMEM


# ---------------------------------------------------------------------------
# Wide path: full reduction axis (N) resident, lane-dense D tiles.
# ---------------------------------------------------------------------------
def _softmax_wide_kernel(x_ref, o_ref, *, d_total, tile_d):
    x = x_ref[...].astype(jnp.float32)
    if d_total % tile_d != 0:
        # Defensive: zero the garbage lanes of the partial last D tile so no
        # NaN/Inf is ever produced (they would stay column-local and the OOB
        # stores are masked anyway, but this is free under the DMA).
        col = (jax.lax.broadcasted_iota(jnp.int32, x.shape, 1)
               + pl.program_id(0) * tile_d)
        x = jnp.where(col < d_total, x, 0.0)
    x_max = jnp.max(x, axis=0, keepdims=True)       # torch.max(x, dim=0, keepdim=True)
    x_exp = jnp.exp(x - x_max)                       # torch.exp(x - x_max)
    part = jnp.sum(x_exp, axis=0, keepdims=True)     # x_exp.sum(dim=0, keepdim=True)
    inv = pl.reciprocal(part, approx=False)          # exact; EUP slot, free at mem-bound
    o_ref[...] = (x_exp * inv).astype(o_ref.dtype)


def _softmax_wide(x, tile_d, vmem_limit):
    N, D = x.shape
    kernel = functools.partial(_softmax_wide_kernel, d_total=D, tile_d=tile_d)
    return pl.pallas_call(
        kernel,
        out_shape=jax.ShapeDtypeStruct((N, D), x.dtype),
        grid=(pl.cdiv(D, tile_d),),
        in_specs=[pl.BlockSpec((N, tile_d), lambda j: (0, j))],
        out_specs=pl.BlockSpec((N, tile_d), lambda j: (0, j)),
        compiler_params=pltpu.CompilerParams(
            dimension_semantics=("parallel",),
            vmem_limit_bytes=vmem_limit,
        ),
    )(x)


# ---------------------------------------------------------------------------
# Tall-N fallback: online (flash-style) two-pass softmax with N tiled.
# ---------------------------------------------------------------------------
def _softmax_stats_kernel(x_ref, m_ref, l_ref, *, n_total, tile_n):
    ni = pl.program_id(1)

    @pl.when(ni == 0)
    def _():
        m_ref[...] = jnp.full_like(m_ref, -jnp.inf)
        l_ref[...] = jnp.zeros_like(l_ref)

    x = x_ref[...].astype(jnp.float32)
    if n_total % tile_n != 0:
        # Rows past N (partial last N tile) must not pollute the reduction.
        row = jax.lax.broadcasted_iota(jnp.int32, x.shape, 0) + ni * tile_n
        x = jnp.where(row < n_total, x, -jnp.inf)

    m_prev = m_ref[...]
    m_new = jnp.maximum(m_prev, jnp.max(x, axis=0, keepdims=True))
    alpha = jnp.exp(m_prev - m_new)                  # 0 when m_prev == -inf
    l_ref[...] = alpha * l_ref[...] + jnp.sum(jnp.exp(x - m_new),
                                              axis=0, keepdims=True)
    m_ref[...] = m_new


def _softmax_normalize_kernel(x_ref, m_ref, l_ref, o_ref):
    x = x_ref[...].astype(jnp.float32)
    inv = pl.reciprocal(l_ref[...], approx=False)
    o_ref[...] = (jnp.exp(x - m_ref[...]) * inv).astype(o_ref.dtype)


def _softmax_tall(x, tile_n, tile_d, vmem_limit):
    N, D = x.shape
    d_tiles = pl.cdiv(D, tile_d)
    n_tiles = pl.cdiv(N, tile_n)

    stats_kernel = functools.partial(_softmax_stats_kernel,
                                     n_total=N, tile_n=tile_n)
    m, l = pl.pallas_call(
        stats_kernel,
        out_shape=(jax.ShapeDtypeStruct((1, D), jnp.float32),
                   jax.ShapeDtypeStruct((1, D), jnp.float32)),
        grid=(d_tiles, n_tiles),
        in_specs=[pl.BlockSpec((tile_n, tile_d), lambda j, i: (i, j))],
        out_specs=(pl.BlockSpec((1, tile_d), lambda j, i: (0, j)),
                   pl.BlockSpec((1, tile_d), lambda j, i: (0, j))),
        compiler_params=pltpu.CompilerParams(
            dimension_semantics=("parallel", "arbitrary"),
            vmem_limit_bytes=vmem_limit,
        ),
    )(x)

    return pl.pallas_call(
        _softmax_normalize_kernel,
        out_shape=jax.ShapeDtypeStruct((N, D), x.dtype),
        grid=(d_tiles, n_tiles),
        in_specs=[pl.BlockSpec((tile_n, tile_d), lambda j, i: (i, j)),
                  pl.BlockSpec((1, tile_d), lambda j, i: (0, j)),
                  pl.BlockSpec((1, tile_d), lambda j, i: (0, j))],
        out_specs=pl.BlockSpec((tile_n, tile_d), lambda j, i: (i, j)),
        compiler_params=pltpu.CompilerParams(
            dimension_semantics=("parallel", "parallel"),
            vmem_limit_bytes=vmem_limit,
        ),
    )(x, m, l)


# ---------------------------------------------------------------------------
# Dispatcher
# ---------------------------------------------------------------------------
def softmax_stable(x, *, force_two_pass=False):
    """Pallas TPU SoftmaxStable.forward: numerically stable softmax over dim 0."""
    assert x.ndim == 2, "expects (N, D); softmax is over axis 0"
    N, D = x.shape
    itemsize = jnp.dtype(x.dtype).itemsize

    cap = _vmem_capacity_bytes()
    vmem_limit = int(min(100 << 20, (cap * 9) // 10))
    budget = (cap * 3) // 4                 # headroom for compiler scratch

    d_lanes = _round_up(D, _LANE)
    # Bytes per lane-column of an (N, tile) block: 2x input + 2x output buffers
    # (double buffering) in the IO dtype, plus ~2 f32 temp slabs (x, x_exp).
    per_lane = N * (4 * itemsize + 8)

    if not force_two_pass and per_lane * _LANE <= budget:
        # Wide path.  Target ~4 MiB per block buffer; clamp to [128, d_lanes].
        target_block_bytes = 4 << 20
        tile = _round_down(max(target_block_bytes // (N * itemsize), _LANE), _LANE)
        tile = max(_LANE, min(tile, d_lanes))
        # v7x has 2 TensorCores: ensure the "parallel" D axis has >= 2 grid
        # steps whenever D spans more than one lane tile.
        if d_lanes > _LANE and tile >= d_lanes:
            tile = max(_LANE, _round_up(d_lanes // 2, _LANE))
        tile = min(tile, _round_down(budget // per_lane, _LANE))
        return _softmax_wide(x, tile, vmem_limit)

    # Tall-N fallback: online two-pass softmax with N tiled ("arbitrary" axis).
    sublane = {4: 8, 2: 16, 1: 32}.get(itemsize, 8)
    tile_n = min(512, _round_up(N, sublane))
    per_lane_tall = tile_n * (4 * itemsize + 8)
    tile_d = _round_down(max((4 << 20) // (tile_n * itemsize), _LANE), _LANE)
    tile_d = max(_LANE, min(tile_d, d_lanes,
                            _round_down(budget // per_lane_tall, _LANE)))
    return _softmax_tall(x, tile_n, tile_d, vmem_limit)


if __name__ == "__main__":
    # SoftmaxStable has no learnable parameters (self.listPeople is unused state).
    key = jax.random.PRNGKey(0)
    seq, hidden = 8, 32
    x = jax.random.normal(key, (seq, hidden), dtype=jnp.float32)

    # Reference: same math as the PyTorch module.
    ref = jnp.exp(x - jnp.max(x, axis=0, keepdims=True))
    ref = ref / jnp.sum(ref, axis=0, keepdims=True)

    out = jax.block_until_ready(softmax_stable(x))
    assert out.shape == x.shape and out.dtype == x.dtype
    assert jnp.allclose(out, ref, atol=1e-6, rtol=1e-6)
    assert jnp.allclose(jnp.sum(out, axis=0), jnp.ones((hidden,)), atol=1e-5)

    # Also exercise the tall-N (online two-pass) fallback on the same small
    # input to validate that path end-to-end.
    out_tall = jax.block_until_ready(softmax_stable(x, force_two_pass=True))
    assert out_tall.shape == x.shape and out_tall.dtype == x.dtype
    assert jnp.allclose(out_tall, ref, atol=1e-6, rtol=1e-6)

    print("KERNEL_OK")
</pallas_src>

<mosaic_0001>
module attributes {stable_mosaic.version = 11 : i64} {
  func.func @_softmax_wide_kernel(%arg0: i32, %arg1: memref<8x128xf32, #tpu.memory_space<vmem>>, %arg2: memref<8x128xf32, #tpu.memory_space<vmem>>) attributes {dimension_semantics = [#tpu.dimension_semantics<parallel>], iteration_bounds = array<i64: 1>, scalar_prefetch = 0 : i64, scratch_operands = 0 : i64, tpu.core_type = #tpu.core_type<tc>, window_params = [{transform_indices = @transform_0, window_bounds = array<i64: 8, 128>}, {transform_indices = @transform_1, window_bounds = array<i64: 8, 128>}]} {
    %c0 = arith.constant 0 : index
    %c0_0 = arith.constant 0 : index
    %0 = vector.load %arg1[%c0, %c0_0] : memref<8x128xf32, #tpu.memory_space<vmem>>, vector<8x128xf32>
    %1 = tpu.iota {dimensions = array<i32: 1>} : vector<8x128xi32>
    %c128_i32 = arith.constant 128 : i32
    %2 = arith.muli %arg0, %c128_i32 : i32
    %3 = vector.broadcast %2 : i32 to vector<8x128xi32>
    %4 = arith.addi %1, %3 : vector<8x128xi32>
    %c32_i32 = arith.constant 32 : i32
    %5 = vector.broadcast %c32_i32 : i32 to vector<8x128xi32>
    %6 = arith.cmpi slt, %4, %5 : vector<8x128xi32>
    %cst = arith.constant 0.000000e+00 : f32
    %7 = vector.broadcast %cst : f32 to vector<8x128xf32>
    %8 = arith.select %6, %0, %7 : vector<8x128xi1>, vector<8x128xf32>
    %cst_1 = arith.constant dense<0xFF800000> : vector<128xf32>
    %9 = vector.multi_reduction <maximumf>, %8, %cst_1 [0] : vector<8x128xf32> to vector<128xf32>
    %10 = vector.shape_cast %9 : vector<128xf32> to vector<1x128xf32>
    %11 = vector.broadcast %10 : vector<1x128xf32> to vector<8x128xf32>
    %12 = arith.subf %8, %11 : vector<8x128xf32>
    %13 = math.exp %12 : vector<8x128xf32>
    %cst_2 = arith.constant dense<0.000000e+00> : vector<128xf32>
    %14 = vector.multi_reduction <add>, %13, %cst_2 [0] : vector<8x128xf32> to vector<128xf32>
    %15 = vector.shape_cast %14 : vector<128xf32> to vector<1x128xf32>
    %16 = tpu.reciprocal %15 : vector<1x128xf32> -> vector<1x128xf32>
    %17 = vector.broadcast %16 : vector<1x128xf32> to vector<8x128xf32>
    %18 = arith.mulf %13, %17 : vector<8x128xf32>
    %c0_3 = arith.constant 0 : index
    %c0_4 = arith.constant 0 : index
    %19 = vector.load %arg2[%c0_3, %c0_4] : memref<8x128xf32, #tpu.memory_space<vmem>>, vector<8x128xf32>
    tpu.vector_store %arg2[%c0_3, %c0_4], %18 {strides = array<i32>} : memref<8x128xf32, #tpu.memory_space<vmem>>, vector<8x128xf32>,
    return
  }
  func.func @transform_0(%arg0: i32) -> (i32, i32) {
    %c0_i32 = arith.constant 0 : i32
    %c0_i32_0 = arith.constant 0 : i32
    return %c0_i32, %arg0 : i32, i32
  }
  func.func @transform_1(%arg0: i32) -> (i32, i32) {
    %c0_i32 = arith.constant 0 : i32
    %c0_i32_0 = arith.constant 0 : i32
    return %c0_i32, %arg0 : i32, i32
  }
}

</mosaic_0001>

<llo_original>
// kernel: tpu_custom_call.1
$region0: #{tpu_custom_call.1}
  #allocation0 [shape = 'u32[]', space=smem, size = 0x4, offset = 0x4, fixed_abs, tag = 'smem constant byte address 0x4 - core index']
  #allocation1 [shape = 'u32[144,128]{1,0:T(1,128)}', space=vmem, size = 0x12000, scoped, tag = 'internal scratch']
  %s0 = inlined_call_operand.hbm [shape: f32[8,32], index: 0, kind: input, shape index: {}]
  %s1 = inlined_call_operand.hbm [shape: f32[8,32], index: 1, kind: output, shape index: {}]
  %s2 = sld [smem:[#allocation0]]
  $region18: #{tpu_custom_call.1} parent=0
    _
  %s4 = ssub.s32 1, %s2
  %s5 = scalar_select 0, %s4, %s2
  $region1: #{tpu_custom_call.1} parent=0
    #allocation2 [shape = 'u8[4096]{0}', space=vmem, size = 0x1000, scoped, tag = 'input window, operand 0, single buffered']
    #allocation3 [shape = 's32[1]{0}', space=sflag, size = 0x4, scoped, tag = 'scoped memory for tpu_custom_call.1']
    #allocation4 [shape = 's32[1]{0}', space=sflag, size = 0x4, scoped, tag = 'scoped memory for tpu_custom_call.1']
    #allocation5 [shape = 'u8[4096]{0}', space=vmem, size = 0x1000, scoped, tag = 'output window, operand 0, single buffered']
    %6 = vsyncpa [#allocation3], 0
    %7 = vsyncpa [#allocation4], 0
    // Predicated region
    $region2: #{tpu_custom_call.1} parent=1 // pred_check
      _
    $region3: #{tpu_custom_call.1} parent=1 // pred_check_branch
      %9 = sbr.rel (0) target = $region5
    $region4: #{tpu_custom_call.1} parent=1 // pred_region
      %s11 = ssub.s32 128, 128
      %12 = vsyncadd [#allocation3], %s11
      %s14 = sshll.u32 [#allocation2], 4
      %s15 = int_to_ptr.vmem [resolvable:$true] %s14
      %17 = dma.hbm_to_vmem [thread:$0]  %s0, 128, %s15, [#allocation3]
    $region5: #{tpu_custom_call.1} parent=1 // pred_fallthru
      _
    // Predicated region
    $region6: #{tpu_custom_call.1} parent=1 // pred_check
      _
    $region7: #{tpu_custom_call.1} parent=1 // pred_check_branch
      %19 = sbr.rel (0) target = $region9
    $region8: #{tpu_custom_call.1} parent=1 // pred_region
      %20 = dma.done [#allocation3], 128
    $region9: #{tpu_custom_call.1} parent=1 // pred_fallthru
      _
    %v21 = vld [vmem:[#allocation2] sm:$0xff]
    %v22 = vlaneseq
    %v23 = vand.u32 %v22, 127
    %s24 = smul.u32 0, 128
    %v25 = vstv %s24
    %v26 = vadd.s32 %v23, %v25
    %vm27 = vcmp.lt.s32.totalorder %v26, 32
    %v28 = vsel %vm27, %v21, 0.0
    %v29 = vrot.slane %v28, 4
    %v30 = vmax.f32 %v28, %v29
    %v31 = vrot.slane %v30, 2
    %v32 = vmax.f32 %v30, %v31
    %v33 = vrot.slane %v32, 1
    %v34 = vmax.f32 %v32, %v33
    %v35 = vsub.f32 %v28, %v34
    %v36 = vmul.f32 %v35, 1.442695
    %v37 = vpow.pop %v36
    %v38 = vrot.slane %v37, 4
    %v39 = vadd.f32 %v37, %v38
    %v40 = vrot.slane %v39, 2
    %v41 = vadd.f32 %v39, %v40
    %v42 = vrot.slane %v41, 1
    %v43 = vadd.f32 %v41, %v42
    %v44 = vrcp.pop %v43
    %v45 = vmul.f32 %v37, %v44
    %46 = vst [vmem:[#allocation5] sm:$0xff] %v45
    // Predicated region
    $region10: #{tpu_custom_call.1} parent=1 // pred_check
      _
    $region11: #{tpu_custom_call.1} parent=1 // pred_check_branch
      %48 = sbr.rel (0) target = $region13
    $region12: #{tpu_custom_call.1} parent=1 // pred_region
      %s50 = ssub.s32 128, 128
      %51 = vsyncadd [#allocation4], %s50
      %s53 = sshll.u32 [#allocation5], 4
      %s54 = int_to_ptr.vmem [resolvable:$true] %s53
      %56 = dma.vmem_to_hbm [thread:$0]  %s54, 128, %s1, [#allocation4]
    $region13: #{tpu_custom_call.1} parent=1 // pred_fallthru
      _
    // Predicated region
    $region14: #{tpu_custom_call.1} parent=1 // pred_check
      _
    $region15: #{tpu_custom_call.1} parent=1 // pred_check_branch
      %58 = sbr.rel (0) target = $region17
    $region16: #{tpu_custom_call.1} parent=1 // pred_region
      %59 = dma.done [#allocation4], 128
    $region17: #{tpu_custom_call.1} parent=1 // pred_fallthru
      _
    %60 = vsyncpa [#allocation3], 1
    %61 = vsyncpa [#allocation4], 1

</llo_original>
